<compile_context>
chip_gen: v7x
topology: tpu7x:2x2x1
jax: 0.10.0
libtpu: 0.0.40
codegen_flags: <defaults>
</compile_context>

<pallas_src>
import functools

import jax
import jax.numpy as jnp
from jax.experimental import pallas as pl
from jax.experimental.pallas import tpu as pltpu


def _round_up(x, m):
    return ((x + m - 1) // m) * m


def _detect_generation():
    try:
        kind = jax.devices()[0].device_kind.lower()
    except Exception:
        return "unknown"
    if "v7" in kind or "7x" in kind:
        return "v7x"
    if "v6" in kind:
        return "v6e"
    if "v5" in kind:
        return "v5e"
    return "unknown"


def _tpu_defaults():
    gen = _detect_generation()
    if gen == "v7x":
        # 64 MiB VMEM, 2 TCs: tighter blocks, deeper logits pipeline.
        return dict(num_parts=2, logits_block_bytes=6 * 1024 * 1024,
                    vmem_cap=48 * 1024 * 1024, n_buf=3)
    if gen in ("v5e", "v6e"):
        # 128 MiB VMEM, single TC: bigger blocks, no second partition.
        return dict(num_parts=1, logits_block_bytes=12 * 1024 * 1024,
                    vmem_cap=100 * 1024 * 1024, n_buf=2)
    return dict(num_parts=1, logits_block_bytes=8 * 1024 * 1024,
                vmem_cap=48 * 1024 * 1024, n_buf=2)


def _pick_class_chunk(C, class_chunk):
    """Class-chunk size for the inner 'arbitrary' axis (must divide C)."""
    if class_chunk is not None:
        cc = int(class_chunk)
        if cc == C or (cc > 0 and cc % 128 == 0 and C % cc == 0):
            return cc
        return C
    # auto: only chunk genuinely large, 128-divisible vocabularies
    if C <= 8192 or C % 128 != 0:
        return C
    for cc in range(4096, 127, -128):
        if C % cc == 0:
            return cc
    return C


def _mlm_loss_kernel(logits_ref, tgt_logit_ref, tgt_ref, sum_ref, cnt_ref,
                     m_sc, s_sc, *, pad, n_rows, tile_rows, tiles_per_part):
    p = pl.program_id(0)       # TensorCore / partition axis ("parallel")
    i = pl.program_id(1)       # row-tile axis ("arbitrary")
    c = pl.program_id(2)       # class-chunk axis ("arbitrary", online LSE)
    num_c = pl.num_programs(2)

    # zero this core's resident output accumulators at the start of its sweep
    @pl.when((i == 0) & (c == 0))
    def _():
        sum_ref[...] = jnp.zeros_like(sum_ref)
        cnt_ref[...] = jnp.zeros_like(cnt_ref)

    # reset the online log-sum-exp state at the start of every row tile
    @pl.when(c == 0)
    def _():
        m_sc[...] = jnp.full_like(m_sc, -jnp.inf)
        s_sc[...] = jnp.zeros_like(s_sc)

    x = logits_ref[...]                                        # (TR, CC), input dtype
    # max in the input dtype (native bf16 max on v6e/v7x); per-row f32 only
    m_chunk = jnp.max(x, axis=-1, keepdims=True).astype(jnp.float32)   # (TR, 1)
    m_old = m_sc[...]
    m_new = jnp.maximum(m_old, m_chunk)
    # f32 cast fused into the single elementwise consumer -> no multi-use f32 copy
    ex_sum = jnp.sum(jnp.exp(x.astype(jnp.float32) - m_new),
                     axis=-1, keepdims=True)                   # (TR, 1)
    s_sc[...] = s_sc[...] * jnp.exp(m_old - m_new) + ex_sum
    m_sc[...] = m_new

    @pl.when(c == num_c - 1)
    def _():
        # global row index of each sublane (masks ragged / clamped-duplicate tiles;
        # rows are fully independent so garbage OOB rows cannot leak into valid ones)
        base = (p * tiles_per_part + i) * tile_rows
        row = base + jax.lax.broadcasted_iota(jnp.int32, (tile_rows, 1), 0)
        in_bounds = row < n_rows                               # (TR, 1) bool

        lse = m_sc[...] + jnp.log(s_sc[...])                   # (TR, 1)
        nll = lse - tgt_logit_ref[...]                         # (TR, 1)
        valid = jnp.logical_and(tgt_ref[...] != pad, in_bounds)

        # elementwise accumulation only; the cross-row reduce happens once in JAX
        sum_ref[...] += jnp.where(valid, nll, 0.0)
        cnt_ref[...] += valid.astype(jnp.float32)


def mlm_loss(y_pred, y_true, *, pad=0, tile_rows=None, num_parts=None,
             logits_block_bytes=None, class_chunk=None):
    """Masked-LM cross-entropy (mean NLL over positions where y_true != pad).

    y_pred: (B, S, C) float logits (f32 or bf16), y_true: (B, S) int targets.
    """
    B, S, C = y_pred.shape
    N = B * S

    defaults = _tpu_defaults()
    if num_parts is None:
        num_parts = defaults["num_parts"]
    if logits_block_bytes is None:
        logits_block_bytes = defaults["logits_block_bytes"]
    vmem_cap = defaults["vmem_cap"]
    n_buf = defaults["n_buf"]

    logits = y_pred.reshape(N, C)                       # keep caller dtype (bf16 ok)
    targets = y_true.reshape(N, 1).astype(jnp.int32)
    # target-logit gather done ONCE outside the kernel (O(N) traffic), passed in
    tgt_clamped = jnp.clip(targets, 0, C - 1)
    tgt_logit = jnp.take_along_axis(logits, tgt_clamped, axis=-1).astype(jnp.float32)

    itemsize = jnp.dtype(logits.dtype).itemsize
    cc = _pick_class_chunk(C, class_chunk)
    num_c_chunks = C // cc

    if tile_rows is None:
        tr = logits_block_bytes // max(1, cc * itemsize)
        tr = max(8, min(1024, (tr // 8) * 8))
    else:
        tr = max(8, (int(tile_rows) // 8) * 8)
    # never exceed the (8-rounded) row count, and keep every partition busy
    tr = min(tr, _round_up(N, 8))
    tr = min(tr, max(8, _round_up(pl.cdiv(N, num_parts), 8)))

    n_tiles = pl.cdiv(N, tr)
    tiles_per_part = pl.cdiv(n_tiles, num_parts)
    grid = (num_parts, tiles_per_part, num_c_chunks)

    def row_map(p, i, c):
        # clamp fully out-of-range tiles onto the last real tile so the DMA stays
        # in bounds; their rows are masked in-kernel via row < N.
        t_idx = p * tiles_per_part + i
        return (jnp.minimum(t_idx, n_tiles - 1), 0)

    def logits_map(p, i, c):
        t_idx = p * tiles_per_part + i
        return (jnp.minimum(t_idx, n_tiles - 1), c)

    kernel = functools.partial(
        _mlm_loss_kernel, pad=pad, n_rows=N, tile_rows=tr,
        tiles_per_part=tiles_per_part)

    logits_spec_kwargs = {}
    if n_buf != 2:
        logits_spec_kwargs["pipeline_mode"] = pl.Buffered(n_buf)
    logits_spec = pl.BlockSpec((tr, cc), logits_map, **logits_spec_kwargs)

    # VMEM budget: n_buf logits buffers + remaining full-tile f32 temporaries
    # (the fused cast/exp value) + small per-row buffers + headroom.
    block_bytes = tr * cc * itemsize
    temp_bytes = 2 * tr * cc * 4
    vmem_limit = min(vmem_cap,
                     max(32 * 1024 * 1024,
                         n_buf * block_bytes + temp_bytes + 6 * 1024 * 1024))

    sum_part, cnt_part = pl.pallas_call(
        kernel,
        out_shape=(
            jax.ShapeDtypeStruct((num_parts * tr, 1), jnp.float32),
            jax.ShapeDtypeStruct((num_parts * tr, 1), jnp.float32),
        ),
        grid_spec=pltpu.PrefetchScalarGridSpec(
            num_scalar_prefetch=0,
            grid=grid,
            in_specs=[
                logits_spec,
                pl.BlockSpec((tr, 1), row_map),     # precomputed target logit
                pl.BlockSpec((tr, 1), row_map),     # targets (for the pad mask)
            ],
            out_specs=[
                pl.BlockSpec((tr, 1), lambda p, i, c: (p, 0)),
                pl.BlockSpec((tr, 1), lambda p, i, c: (p, 0)),
            ],
            scratch_shapes=[
                pltpu.VMEM((tr, 1), jnp.float32),   # running row max
                pltpu.VMEM((tr, 1), jnp.float32),   # running row sum-exp
            ],
        ),
        compiler_params=pltpu.CompilerParams(
            dimension_semantics=("parallel", "arbitrary", "arbitrary"),
            vmem_limit_bytes=int(vmem_limit)),
    )(logits, tgt_logit, targets)

    # mean over non-ignored positions (CrossEntropyLoss reduction='mean');
    # all-ignored batch -> NaN (0/0), matching PyTorch.
    return jnp.sum(sum_part) / jnp.sum(cnt_part)


def _reference_loss(y_pred, y_true, pad=0):
    # plain-JAX reference of CrossEntropyLoss(ignore_index=pad)
    B, S, C = y_pred.shape
    logits = y_pred.reshape(B * S, C).astype(jnp.float32)
    tgt = y_true.reshape(B * S).astype(jnp.int32)
    logp = jax.nn.log_softmax(logits, axis=-1)
    nll = -jnp.take_along_axis(logp, tgt[:, None], axis=-1)[:, 0]
    valid = (tgt != pad).astype(jnp.float32)
    return jnp.sum(nll * valid) / jnp.sum(valid)


if __name__ == "__main__":
    key = jax.random.PRNGKey(0)
    keys = jax.random.split(key, 12)

    # case 1: small, even shapes, f32
    B, S, C = 2, 8, 32
    y_pred = jax.random.normal(keys[0], (B, S, C), dtype=jnp.float32)
    y_true = jax.random.randint(keys[1], (B, S), 0, C, dtype=jnp.int32)
    y_true = jnp.where(jax.random.bernoulli(keys[2], 0.25, (B, S)), 0, y_true)
    out = jax.block_until_ready(mlm_loss(y_pred, y_true, pad=0))
    ref = _reference_loss(y_pred, y_true, pad=0)
    assert jnp.allclose(out, ref, atol=1e-5, rtol=1e-5), (out, ref)

    # case 2: ragged row count (exercises in-kernel tail masking, no padded copy)
    B2, S2, C2 = 3, 7, 33
    y_pred2 = jax.random.normal(keys[3], (B2, S2, C2), dtype=jnp.float32)
    y_true2 = jax.random.randint(keys[4], (B2, S2), 0, C2, dtype=jnp.int32)
    y_true2 = jnp.where(jax.random.bernoulli(keys[5], 0.25, (B2, S2)), 0, y_true2)
    out2 = jax.block_until_ready(mlm_loss(y_pred2, y_true2, pad=0))
    ref2 = _reference_loss(y_pred2, y_true2, pad=0)
    assert jnp.allclose(out2, ref2, atol=1e-5, rtol=1e-5), (out2, ref2)

    # case 3: forced class-chunking + multiple row tiles (online LSE path)
    B3, S3, C3 = 2, 16, 256
    y_pred3 = jax.random.normal(keys[6], (B3, S3, C3), dtype=jnp.float32)
    y_true3 = jax.random.randint(keys[7], (B3, S3), 0, C3, dtype=jnp.int32)
    y_true3 = jnp.where(jax.random.bernoulli(keys[8], 0.25, (B3, S3)), 0, y_true3)
    out3 = jax.block_until_ready(
        mlm_loss(y_pred3, y_true3, pad=0, class_chunk=128, tile_rows=16))
    ref3 = _reference_loss(y_pred3, y_true3, pad=0)
    assert jnp.allclose(out3, ref3, atol=1e-5, rtol=1e-5), (out3, ref3)

    # case 4: bf16 logits read directly by the kernel
    B4, S4, C4 = 2, 8, 64
    y_pred4 = jax.random.normal(keys[9], (B4, S4, C4), dtype=jnp.float32)
    y_true4 = jax.random.randint(keys[10], (B4, S4), 0, C4, dtype=jnp.int32)
    y_true4 = jnp.where(jax.random.bernoulli(keys[11], 0.25, (B4, S4)), 0, y_true4)
    y_pred4_bf16 = y_pred4.astype(jnp.bfloat16)
    out4 = jax.block_until_ready(mlm_loss(y_pred4_bf16, y_true4, pad=0))
    ref4 = _reference_loss(y_pred4_bf16.astype(jnp.float32), y_true4, pad=0)
    assert jnp.allclose(out4, ref4, atol=1e-4, rtol=1e-4), (out4, ref4)

    print("KERNEL_OK")
</pallas_src>

<mosaic_0001>
module attributes {stable_mosaic.version = 11 : i64} {
  func.func @_mlm_loss_kernel(%arg0: i32, %arg1: i32, %arg2: i32, %arg3: memref<16x32xf32, #tpu.memory_space<vmem>>, %arg4: memref<16x1xf32, #tpu.memory_space<vmem>>, %arg5: memref<16x1xi32, #tpu.memory_space<vmem>>, %arg6: memref<16x1xf32, #tpu.memory_space<vmem>>, %arg7: memref<16x1xf32, #tpu.memory_space<vmem>>, %arg8: memref<16x1xf32, #tpu.memory_space<vmem>>, %arg9: memref<16x1xf32, #tpu.memory_space<vmem>>) attributes {dimension_semantics = [#tpu.dimension_semantics<parallel>, #tpu.dimension_semantics<arbitrary>, #tpu.dimension_semantics<arbitrary>], iteration_bounds = array<i64: 1, 1, 1>, scalar_prefetch = 0 : i64, scratch_operands = 2 : i64, tpu.core_type = #tpu.core_type<tc>, window_params = [{transform_indices = @transform_0, window_bounds = array<i64: 16, 32>}, {transform_indices = @transform_1, window_bounds = array<i64: 16, 1>}, {transform_indices = @transform_2, window_bounds = array<i64: 16, 1>}, {transform_indices = @transform_3, window_bounds = array<i64: 16, 1>}, {transform_indices = @transform_4, window_bounds = array<i64: 16, 1>}]} {
    %c0_i32 = arith.constant 0 : i32
    %0 = arith.cmpi eq, %arg1, %c0_i32 : i32
    %c0_i32_0 = arith.constant 0 : i32
    %1 = arith.cmpi eq, %arg2, %c0_i32_0 : i32
    %2 = arith.andi %0, %1 : i1
    %3 = arith.extui %2 : i1 to i32
    %c0_i32_1 = arith.constant 0 : i32
    %4 = arith.cmpi ne, %3, %c0_i32_1 : i32
    scf.if %4 {
      %cst_16 = arith.constant 0.000000e+00 : f32
      %28 = vector.broadcast %cst_16 : f32 to vector<16x1xf32>
      %c0_17 = arith.constant 0 : index
      %c0_18 = arith.constant 0 : index
      %29 = vector.load %arg6[%c0_17, %c0_18] : memref<16x1xf32, #tpu.memory_space<vmem>>, vector<16x1xf32>
      tpu.vector_store %arg6[%c0_17, %c0_18], %28 {strides = array<i32>} : memref<16x1xf32, #tpu.memory_space<vmem>>, vector<16x1xf32>,
      %cst_19 = arith.constant 0.000000e+00 : f32
      %30 = vector.broadcast %cst_19 : f32 to vector<16x1xf32>
      %c0_20 = arith.constant 0 : index
      %c0_21 = arith.constant 0 : index
      %31 = vector.load %arg7[%c0_20, %c0_21] : memref<16x1xf32, #tpu.memory_space<vmem>>, vector<16x1xf32>
      tpu.vector_store %arg7[%c0_20, %c0_21], %30 {strides = array<i32>} : memref<16x1xf32, #tpu.memory_space<vmem>>, vector<16x1xf32>,
    } else {
    }
    %c0_i32_2 = arith.constant 0 : i32
    %5 = arith.cmpi eq, %arg2, %c0_i32_2 : i32
    %6 = arith.extui %5 : i1 to i32
    %c0_i32_3 = arith.constant 0 : i32
    %7 = arith.cmpi ne, %6, %c0_i32_3 : i32
    scf.if %7 {
      %cst_16 = arith.constant 0xFF800000 : f32
      %28 = vector.broadcast %cst_16 : f32 to vector<16x1xf32>
      %c0_17 = arith.constant 0 : index
      %c0_18 = arith.constant 0 : index
      %29 = vector.load %arg8[%c0_17, %c0_18] : memref<16x1xf32, #tpu.memory_space<vmem>>, vector<16x1xf32>
      tpu.vector_store %arg8[%c0_17, %c0_18], %28 {strides = array<i32>} : memref<16x1xf32, #tpu.memory_space<vmem>>, vector<16x1xf32>,
      %cst_19 = arith.constant 0.000000e+00 : f32
      %30 = vector.broadcast %cst_19 : f32 to vector<16x1xf32>
      %c0_20 = arith.constant 0 : index
      %c0_21 = arith.constant 0 : index
      %31 = vector.load %arg9[%c0_20, %c0_21] : memref<16x1xf32, #tpu.memory_space<vmem>>, vector<16x1xf32>
      tpu.vector_store %arg9[%c0_20, %c0_21], %30 {strides = array<i32>} : memref<16x1xf32, #tpu.memory_space<vmem>>, vector<16x1xf32>,
    } else {
    }
    %c0 = arith.constant 0 : index
    %c0_4 = arith.constant 0 : index
    %8 = vector.load %arg3[%c0, %c0_4] : memref<16x32xf32, #tpu.memory_space<vmem>>, vector<16x32xf32>
    %cst = arith.constant dense<0xFF800000> : vector<16xf32>
    %9 = vector.multi_reduction <maximumf>, %8, %cst [1] : vector<16x32xf32> to vector<16xf32>
    %10 = vector.shape_cast %9 : vector<16xf32> to vector<16x1xf32>
    %c0_5 = arith.constant 0 : index
    %c0_6 = arith.constant 0 : index
    %11 = vector.load %arg8[%c0_5, %c0_6] : memref<16x1xf32, #tpu.memory_space<vmem>>, vector<16x1xf32>
    %12 = arith.maximumf %11, %10 : vector<16x1xf32>
    %13 = vector.broadcast %12 : vector<16x1xf32> to vector<16x32xf32>
    %14 = arith.subf %8, %13 : vector<16x32xf32>
    %15 = math.exp %14 : vector<16x32xf32>
    %cst_7 = arith.constant dense<0.000000e+00> : vector<16xf32>
    %16 = vector.multi_reduction <add>, %15, %cst_7 [1] : vector<16x32xf32> to vector<16xf32>
    %17 = vector.shape_cast %16 : vector<16xf32> to vector<16x1xf32>
    %c0_8 = arith.constant 0 : index
    %c0_9 = arith.constant 0 : index
    %18 = vector.load %arg9[%c0_8, %c0_9] : memref<16x1xf32, #tpu.memory_space<vmem>>, vector<16x1xf32>
    %19 = arith.subf %11, %12 : vector<16x1xf32>
    %20 = math.exp %19 : vector<16x1xf32>
    %21 = arith.mulf %18, %20 : vector<16x1xf32>
    %22 = arith.addf %21, %17 : vector<16x1xf32>
    %c0_10 = arith.constant 0 : index
    %c0_11 = arith.constant 0 : index
    %23 = vector.load %arg9[%c0_10, %c0_11] : memref<16x1xf32, #tpu.memory_space<vmem>>, vector<16x1xf32>
    tpu.vector_store %arg9[%c0_10, %c0_11], %22 {strides = array<i32>} : memref<16x1xf32, #tpu.memory_space<vmem>>, vector<16x1xf32>,
    %c0_12 = arith.constant 0 : index
    %c0_13 = arith.constant 0 : index
    %24 = vector.load %arg8[%c0_12, %c0_13] : memref<16x1xf32, #tpu.memory_space<vmem>>, vector<16x1xf32>
    tpu.vector_store %arg8[%c0_12, %c0_13], %12 {strides = array<i32>} : memref<16x1xf32, #tpu.memory_space<vmem>>, vector<16x1xf32>,
    %c0_i32_14 = arith.constant 0 : i32
    %25 = arith.cmpi eq, %arg2, %c0_i32_14 : i32
    %26 = arith.extui %25 : i1 to i32
    %c0_i32_15 = arith.constant 0 : i32
    %27 = arith.cmpi ne, %26, %c0_i32_15 : i32
    scf.if %27 {
      %c1_i32 = arith.constant 1 : i32
      %28 = arith.muli %arg0, %c1_i32 : i32
      %29 = arith.addi %28, %arg1 : i32
      %c16_i32 = arith.constant 16 : i32
      %30 = arith.muli %29, %c16_i32 : i32
      %31 = tpu.iota {dimensions = array<i32: 0>} : vector<16x1xi32>
      %32 = vector.broadcast %30 : i32 to vector<16x1xi32>
      %33 = arith.addi %32, %31 : vector<16x1xi32>
      %c16_i32_16 = arith.constant 16 : i32
      %34 = vector.broadcast %c16_i32_16 : i32 to vector<16x1xi32>
      %35 = arith.cmpi slt, %33, %34 : vector<16x1xi32>
      %c0_17 = arith.constant 0 : index
      %c0_18 = arith.constant 0 : index
      %36 = vector.load %arg8[%c0_17, %c0_18] : memref<16x1xf32, #tpu.memory_space<vmem>>, vector<16x1xf32>
      %c0_19 = arith.constant 0 : index
      %c0_20 = arith.constant 0 : index
      %37 = vector.load %arg9[%c0_19, %c0_20] : memref<16x1xf32, #tpu.memory_space<vmem>>, vector<16x1xf32>
      %38 = math.log %37 : vector<16x1xf32>
      %39 = arith.addf %36, %38 : vector<16x1xf32>
      %c0_21 = arith.constant 0 : index
      %c0_22 = arith.constant 0 : index
      %40 = vector.load %arg4[%c0_21, %c0_22] : memref<16x1xf32, #tpu.memory_space<vmem>>, vector<16x1xf32>
      %41 = arith.subf %39, %40 : vector<16x1xf32>
      %c0_23 = arith.constant 0 : index
      %c0_24 = arith.constant 0 : index
      %42 = vector.load %arg5[%c0_23, %c0_24] : memref<16x1xi32, #tpu.memory_space<vmem>>, vector<16x1xi32>
      %c0_i32_25 = arith.constant 0 : i32
      %43 = vector.broadcast %c0_i32_25 : i32 to vector<16x1xi32>
      %44 = arith.cmpi ne, %42, %43 : vector<16x1xi32>
      %45 = arith.andi %44, %35 : vector<16x1xi1>
      %c0_26 = arith.constant 0 : index
      %c0_27 = arith.constant 0 : index
      %46 = vector.load %arg6[%c0_26, %c0_27] : memref<16x1xf32, #tpu.memory_space<vmem>>, vector<16x1xf32>
      %cst_28 = arith.constant 0.000000e+00 : f32
      %47 = vector.broadcast %cst_28 : f32 to vector<16x1xf32>
      %48 = arith.select %45, %41, %47 : vector<16x1xi1>, vector<16x1xf32>
      %49 = arith.addf %46, %48 : vector<16x1xf32>
      %c0_29 = arith.constant 0 : index
      %c0_30 = arith.constant 0 : index
      %50 = vector.load %arg6[%c0_29, %c0_30] : memref<16x1xf32, #tpu.memory_space<vmem>>, vector<16x1xf32>
      tpu.vector_store %arg6[%c0_29, %c0_30], %49 {strides = array<i32>} : memref<16x1xf32, #tpu.memory_space<vmem>>, vector<16x1xf32>,
      %c0_31 = arith.constant 0 : index
      %c0_32 = arith.constant 0 : index
      %51 = vector.load %arg7[%c0_31, %c0_32] : memref<16x1xf32, #tpu.memory_space<vmem>>, vector<16x1xf32>
      %52 = arith.extui %45 : vector<16x1xi1> to vector<16x1xi32>
      %53 = arith.sitofp %52 : vector<16x1xi32> to vector<16x1xf32>
      %54 = arith.addf %51, %53 : vector<16x1xf32>
      %c0_33 = arith.constant 0 : index
      %c0_34 = arith.constant 0 : index
      %55 = vector.load %arg7[%c0_33, %c0_34] : memref<16x1xf32, #tpu.memory_space<vmem>>, vector<16x1xf32>
      tpu.vector_store %arg7[%c0_33, %c0_34], %54 {strides = array<i32>} : memref<16x1xf32, #tpu.memory_space<vmem>>, vector<16x1xf32>,
    } else {
    }
    return
  }
  func.func @transform_0(%arg0: i32, %arg1: i32, %arg2: i32) -> (i32, i32) {
    %c1_i32 = arith.constant 1 : i32
    %0 = arith.muli %arg0, %c1_i32 : i32
    %1 = arith.addi %0, %arg1 : i32
    %c0_i32 = arith.constant 0 : i32
    %2 = arith.minsi %1, %c0_i32 : i32
    %c0_i32_0 = arith.constant 0 : i32
    return %2, %arg2 : i32, i32
  }
  func.func @transform_1(%arg0: i32, %arg1: i32, %arg2: i32) -> (i32, i32) {
    %c1_i32 = arith.constant 1 : i32
    %0 = arith.muli %arg0, %c1_i32 : i32
    %1 = arith.addi %0, %arg1 : i32
    %c0_i32 = arith.constant 0 : i32
    %2 = arith.minsi %1, %c0_i32 : i32
    %c0_i32_0 = arith.constant 0 : i32
    %c0_i32_1 = arith.constant 0 : i32
    return %2, %c0_i32_0 : i32, i32
  }
  func.func @transform_2(%arg0: i32, %arg1: i32, %arg2: i32) -> (i32, i32) {
    %c1_i32 = arith.constant 1 : i32
    %0 = arith.muli %arg0, %c1_i32 : i32
    %1 = arith.addi %0, %arg1 : i32
    %c0_i32 = arith.constant 0 : i32
    %2 = arith.minsi %1, %c0_i32 : i32
    %c0_i32_0 = arith.constant 0 : i32
    %c0_i32_1 = arith.constant 0 : i32
    return %2, %c0_i32_0 : i32, i32
  }
  func.func @transform_3(%arg0: i32, %arg1: i32, %arg2: i32) -> (i32, i32) {
    %c0_i32 = arith.constant 0 : i32
    %c0_i32_0 = arith.constant 0 : i32
    return %arg0, %c0_i32 : i32, i32
  }
  func.func @transform_4(%arg0: i32, %arg1: i32, %arg2: i32) -> (i32, i32) {
    %c0_i32 = arith.constant 0 : i32
    %c0_i32_0 = arith.constant 0 : i32
    return %arg0, %c0_i32 : i32, i32
  }
}

</mosaic_0001>

<llo_original>
// kernel: tpu_custom_call.1
$region0: #{tpu_custom_call.1}
  #allocation0 [shape = 'u32[]', space=smem, size = 0x4, offset = 0x4, fixed_abs, tag = 'smem constant byte address 0x4 - core index']
  #allocation1 [shape = 'u32[144,128]{1,0:T(1,128)}', space=vmem, size = 0x12000, scoped, tag = 'internal scratch']
  #allocation2 [shape = 'f32[16,1]{1,0:T(8,128)}', space=vmem, size = 0x2000, scoped, tag = 'scratch operand']
  #allocation3 [shape = 'f32[16,1]{1,0:T(8,128)}', space=vmem, size = 0x2000, scoped, tag = 'scratch operand']
  %s0 = inlined_call_operand.vmem [shape: f32[16,32], index: 0, kind: input, shape index: {}]
  %s1 = inlined_call_operand.vmem [shape: f32[16,1], index: 1, kind: input, shape index: {}]
  %s2 = inlined_call_operand.vmem [shape: s32[16,1], index: 2, kind: input, shape index: {}]
  %s3 = inlined_call_operand.vmem [shape: f32[16,1], index: 3, kind: output, shape index: {0}]
  %s4 = inlined_call_operand.vmem [shape: f32[16,1], index: 4, kind: output, shape index: {1}]
  %5 = xla_tuple %s3, %s4
  %s6 = sld [smem:[#allocation0]]
  $region42: #{tpu_custom_call.1} parent=0
    _
  %s8 = ssub.s32 1, %s6
  %s9 = scalar_select 0, %s8, %s6
  // Predicated region
  $region2: #{tpu_custom_call.1} parent=0 // pred_check
    _
  $region3: #{tpu_custom_call.1} parent=0 // pred_check_branch
    %11 = sbr.rel (0) target = $region5
  $region4: #{tpu_custom_call.1} parent=0 // pred_region
    %s12 = sadd.s32 0, 0
    %p13 = scmp.lt.s32.totalorder %s12, 0
    %s14 = scalar_select %p13, %s12, 0
    %s15 = smul.u32 2, %s14
    %p16 = scmp.lt.s32.totalorder %s15, 1
    %s17 = scalar_select %p16, %s15, 1
    %s18 = smul.addr %s17, 8
    %s19 = scalar_lea.vmem %s0, %s18
    %s20 = sadd.s32 0, 0
    %p21 = scmp.lt.s32.totalorder %s20, 0
    %s22 = scalar_select %p21, %s20, 0
    %s23 = smul.u32 2, %s22
  $region5: #{tpu_custom_call.1} parent=0 // pred_fallthru
    _
  // Predicated region
  $region6: #{tpu_custom_call.1} parent=0 // pred_check
    _
  $region7: #{tpu_custom_call.1} parent=0 // pred_check_branch
    %25 = sbr.rel (0) target = $region9
  $region8: #{tpu_custom_call.1} parent=0 // pred_region
    %s26 = sadd.s32 0, 0
    %p27 = scmp.lt.s32.totalorder %s26, 0
    %s28 = scalar_select %p27, %s26, 0
    %s29 = smul.u32 2, %s28
    %p30 = scmp.lt.s32.totalorder %s29, 1
    %s31 = scalar_select %p30, %s29, 1
    %s32 = smul.addr %s31, 8
    %s33 = scalar_lea.vmem %s1, %s32
    %s34 = sadd.s32 0, 0
    %p35 = scmp.lt.s32.totalorder %s34, 0
    %s36 = scalar_select %p35, %s34, 0
    %s37 = smul.u32 2, %s36
  $region9: #{tpu_custom_call.1} parent=0 // pred_fallthru
    _
  // Predicated region
  $region10: #{tpu_custom_call.1} parent=0 // pred_check
    _
  $region11: #{tpu_custom_call.1} parent=0 // pred_check_branch
    %39 = sbr.rel (0) target = $region13
  $region12: #{tpu_custom_call.1} parent=0 // pred_region
    %s40 = sadd.s32 0, 0
    %p41 = scmp.lt.s32.totalorder %s40, 0
    %s42 = scalar_select %p41, %s40, 0
    %s43 = smul.u32 2, %s42
    %p44 = scmp.lt.s32.totalorder %s43, 1
    %s45 = scalar_select %p44, %s43, 1
    %s46 = smul.addr %s45, 8
    %s47 = scalar_lea.vmem %s2, %s46
    %s48 = sadd.s32 0, 0
    %p49 = scmp.lt.s32.totalorder %s48, 0
    %s50 = scalar_select %p49, %s48, 0
    %s51 = smul.u32 2, %s50
  $region13: #{tpu_custom_call.1} parent=0 // pred_fallthru
    _
  %s52 = sadd.s32 0, 0
  %p53 = scmp.lt.s32.totalorder %s52, 0
  %s54 = scalar_select %p53, %s52, 0
  %s55 = smul.u32 2, %s54
  %p56 = scmp.lt.s32.totalorder %s55, 1
  %s57 = scalar_select %p56, %s55, 1
  %s58 = smul.addr %s57, 8
  %s59 = scalar_lea.vmem %s0, %s58
  %s60 = sadd.s32 0, 0
  %p61 = scmp.lt.s32.totalorder %s60, 0
  %s62 = scalar_select %p61, %s60, 0
  %s63 = smul.u32 2, %s62
  %p64 = scmp.lt.s32.totalorder %s63, 1
  %s65 = scalar_select %p64, %s63, 1
  %s66 = smul.addr %s65, 8
  %s67 = scalar_lea.vmem %s1, %s66
  %s68 = sadd.s32 0, 0
  %p69 = scmp.lt.s32.totalorder %s68, 0
  %s70 = scalar_select %p69, %s68, 0
  %s71 = smul.u32 2, %s70
  %p72 = scmp.lt.s32.totalorder %s71, 1
  %s73 = scalar_select %p72, %s71, 1
  %s74 = smul.addr %s73, 8
  %s75 = scalar_lea.vmem %s2, %s74
  %s76 = sadd.s32 0, 0
  %p77 = scmp.lt.s32.totalorder %s76, 0
  %s78 = scalar_select %p77, %s76, 0
  %s79 = smul.u32 2, %s78
  %p80 = scmp.lt.s32.totalorder %s79, 1
  %s81 = scalar_select %p80, %s79, 1
  %s82 = smul.addr %s81, 8
  %s83 = scalar_lea.vmem %s0, %s82
  %s84 = sadd.s32 0, 0
  %p85 = scmp.lt.s32.totalorder %s84, 0
  %s86 = scalar_select %p85, %s84, 0
  %s87 = smul.u32 2, %s86
  %s88 = sadd.s32 0, 0
  %p89 = scmp.lt.s32.totalorder %s88, 0
  %s90 = scalar_select %p89, %s88, 0
  %s91 = smul.u32 2, %s90
  %p92 = scmp.lt.s32.totalorder %s91, 1
  %s93 = scalar_select %p92, %s91, 1
  %s94 = smul.addr %s93, 8
  %s95 = scalar_lea.vmem %s1, %s94
  %s96 = sadd.s32 0, 0
  %p97 = scmp.lt.s32.totalorder %s96, 0
  %s98 = scalar_select %p97, %s96, 0
  %s99 = smul.u32 2, %s98
  %s100 = sadd.s32 0, 0
  %p101 = scmp.lt.s32.totalorder %s100, 0
  %s102 = scalar_select %p101, %s100, 0
  %s103 = smul.u32 2, %s102
  %p104 = scmp.lt.s32.totalorder %s103, 1
  %s105 = scalar_select %p104, %s103, 1
  %s106 = smul.addr %s105, 8
  %s107 = scalar_lea.vmem %s2, %s106
  %s108 = sadd.s32 0, 0
  %p109 = scmp.lt.s32.totalorder %s108, 0
  %s110 = scalar_select %p109, %s108, 0
  %s111 = smul.u32 2, %s110
  %p112 = scmp.eq.s32.totalorder 0, 0
  %p113 = scmp.eq.s32.totalorder 0, 0
  %p114 = pnand %p112, %p113
  %p115 = pneg %p114
  // Predicated region
  $region14: #{tpu_custom_call.1} parent=0 // pred_check
    _
  $region15: #{tpu_custom_call.1} parent=0 // pred_check_branch
    %117 = sbr.rel (%p114) target = $region17
  $region16: #{tpu_custom_call.1} parent=0 // pred_region
    %vm118 = vcmask 7168
    %119 = vst.msk [vmem:[%s3] sm:$0xff] %vm118, 0.0
    %120 = vst.msk [vmem:[%s3 + $0x8] sm:$0xff] %vm118, 0.0
    %121 = vst.msk [vmem:[%s4] sm:$0xff] %vm118, 0.0
    %122 = vst.msk [vmem:[%s4 + $0x8] sm:$0xff] %vm118, 0.0
  $region17: #{tpu_custom_call.1} parent=0 // pred_fallthru
    _
  // Predicated region
  $region18: #{tpu_custom_call.1} parent=0 // pred_check
    %p123 = pneg %p113
  $region19: #{tpu_custom_call.1} parent=0 // pred_check_branch
    %125 = sbr.rel (%p123) target = $region21
  $region20: #{tpu_custom_call.1} parent=0 // pred_region
    %vm126 = vcmask 7168
    %127 = vst.msk [vmem:[#allocation2] sm:$0xff] %vm126, -inf
    %128 = vst.msk [vmem:[#allocation2 + $0x8] sm:$0xff] %vm126, -inf
    %129 = vst.msk [vmem:[#allocation3] sm:$0xff] %vm126, 0.0
    %130 = vst.msk [vmem:[#allocation3 + $0x8] sm:$0xff] %vm126, 0.0
  $region21: #{tpu_custom_call.1} parent=0 // pred_fallthru
    _
  %v131 = vld [vmem:[%s83] sm:$0xff]
  %v132 = vld [vmem:[%s83 + $0x8] sm:$0xff]
  %vm133 = vcmask 261120
  %v134 = vsel %vm133, %v131, -inf
  %135 = vmax.xlane.f32.xlu0 %v134
  %v136 = vpop.xlane.xlu0 %135
  %v137 = vsel %vm133, %v132, -inf
  %138 = vmax.xlane.f32.xlu0 %v137
  %v139 = vpop.xlane.xlu0 %138
  %v140 = vld [vmem:[#allocation2] sm:$0xff]
  %v141 = vld [vmem:[#allocation2 + $0x8] sm:$0xff]
  %v142 = vmax.f32 %v140, %v136
  %v143 = vmax.f32 %v141, %v139
  %145 = vset.pattern.permute.xlu0 0
  %146 = vperm.xlu0 %145, %v142
  %v147 = vpop.permute.xlu0 %146
  %150 = vset.pattern.permute.xlu0 0
  %151 = vperm.xlu0 %150, %v143
  %v152 = vpop.permute.xlu0 %151
  %v154 = vsub.f32 %v131, %v147
  %v155 = vsub.f32 %v132, %v152
  %v156 = vmul.f32 %v154, 1.442695
  %v157 = vpow.pop %v156
  %v158 = vmul.f32 %v155, 1.442695
  %v159 = vpow.pop %v158
  %v160 = vsel %vm133, %v157, 0.0
  %161 = vadd.xlane.f32.xlu0 %v160
  %v162 = vpop.xlane.xlu0 %161
  %v163 = vsel %vm133, %v159, 0.0
  %164 = vadd.xlane.f32.xlu0 %v163
  %v165 = vpop.xlane.xlu0 %164
  %v166 = vld [vmem:[#allocation3] sm:$0xff]
  %v167 = vld [vmem:[#allocation3 + $0x8] sm:$0xff]
  %v168 = vsub.f32 %v140, %v142
  %v169 = vsub.f32 %v141, %v143
  %v170 = vmul.f32 %v168, 1.442695
  %v171 = vpow.pop %v170
  %v172 = vmul.f32 %v169, 1.442695
  %v173 = vpow.pop %v172
  %v174 = vmul.f32 %v166, %v171
  %v175 = vmul.f32 %v167, %v173
  %v176 = vadd.f32 %v174, %v162
  %v177 = vadd.f32 %v175, %v165
  %vm178 = vcmask 7168
  %179 = vst.msk [vmem:[#allocation3] sm:$0xff] %vm178, %v176
  %180 = vst.msk [vmem:[#allocation3 + $0x8] sm:$0xff] %vm178, %v177
  %181 = vst.msk [vmem:[#allocation2] sm:$0xff] %vm178, %v142
  %182 = vst.msk [vmem:[#allocation2 + $0x8] sm:$0xff] %vm178, %v143
  // Predicated region
  $region22: #{tpu_custom_call.1} parent=0 // pred_check
    %p183 = pneg %p113
  $region23: #{tpu_custom_call.1} parent=0 // pred_check_branch
    %185 = sbr.rel (%p183) target = $region25
  $region24: #{tpu_custom_call.1} parent=0 // pred_region
    %s186 = sadd.s32 0, 0
    %s187 = smul.u32 %s186, 16
    %v188 = vlaneseq
    %v189 = vshrl.u32 %v188, 7
    %v190 = vadd.s32 %v189, 8
    %v191 = vstv %s187
    %v192 = vadd.s32 %v191, %v189
    %v193 = vadd.s32 %v191, %v190
    %vm194 = vcmp.lt.s32.totalorder %v192, 16
    %vm195 = vcmp.lt.s32.totalorder %v193, 16
    %v196 = vld [vmem:[#allocation2] sm:$0xff]
    %v197 = vld [vmem:[#allocation2 + $0x8] sm:$0xff]
    %v198 = vld [vmem:[#allocation3] sm:$0xff]
    %v199 = vld [vmem:[#allocation3 + $0x8] sm:$0xff]
    %v200 = vlog2.pop %v198
    %v201 = vmul.f32 %v200, 0.6931472
    %v202 = vlog2.pop %v199
    %v203 = vmul.f32 %v202, 0.6931472
    %v204 = vadd.f32 %v196, %v201
    %v205 = vadd.f32 %v197, %v203
    %v206 = vld [vmem:[%s95] sm:$0xff]
    %v207 = vld [vmem:[%s95 + $0x8] sm:$0xff]
    %v208 = vsub.f32 %v204, %v206
    %v209 = vsub.f32 %v205, %v207
    %v210 = vld [vmem:[%s107] sm:$0xff]
    %v211 = vld [vmem:[%s107 + $0x8] sm:$0xff]
    %vm212 = vcmp.ne.s32.totalorder %v210, 0
    %vm213 = vcmp.ne.s32.totalorder %v211, 0
    %vm214 = vmand %vm212, %vm194
    %vm215 = vmand %vm213, %vm195
    %v216 = vld [vmem:[%s3] sm:$0xff]
    %v217 = vld [vmem:[%s3 + $0x8] sm:$0xff]
    %v218 = vsel %vm214, %v208, 0.0
    %v219 = vsel %vm215, %v209, 0.0
    %v220 = vadd.f32 %v216, %v218
    %v221 = vadd.f32 %v217, %v219
    %222 = vst.msk [vmem:[%s3] sm:$0xff] %vm178, %v220
    %223 = vst.msk [vmem:[%s3 + $0x8] sm:$0xff] %vm178, %v221
    %v224 = vld [vmem:[%s4] sm:$0xff]
    %v225 = vld [vmem:[%s4 + $0x8] sm:$0xff]
    %v226 = vsel %vm214, 1, 0
    %v227 = vsel %vm215, 1, 0
    %v228 = vcvt.s32.f32 %v226
    %v229 = vcvt.s32.f32 %v227
    %v230 = vadd.f32 %v224, %v228
    %v231 = vadd.f32 %v225, %v229
    %232 = vst.msk [vmem:[%s4] sm:$0xff] %vm178, %v230
    %233 = vst.msk [vmem:[%s4 + $0x8] sm:$0xff] %vm178, %v231
  $region25: #{tpu_custom_call.1} parent=0 // pred_fallthru
    _
  // Predicated region
  $region26: #{tpu_custom_call.1} parent=0 // pred_check
    _
  $region27: #{tpu_custom_call.1} parent=0 // pred_check_branch
    %235 = sbr.rel (0) target = $region29
  $region28: #{tpu_custom_call.1} parent=0 // pred_region
    _
  $region29: #{tpu_custom_call.1} parent=0 // pred_fallthru
    _
  // Predicated region
  $region30: #{tpu_custom_call.1} parent=0 // pred_check
    _
  $region31: #{tpu_custom_call.1} parent=0 // pred_check_branch
    %237 = sbr.rel (0) target = $region33
  $region32: #{tpu_custom_call.1} parent=0 // pred_region
    _
  $region33: #{tpu_custom_call.1} parent=0 // pred_fallthru
    _
  // Predicated region
  $region34: #{tpu_custom_call.1} parent=0 // pred_check
    _
  $region35: #{tpu_custom_call.1} parent=0 // pred_check_branch
    %239 = sbr.rel (0) target = $region37
  $region36: #{tpu_custom_call.1} parent=0 // pred_region
    _
  $region37: #{tpu_custom_call.1} parent=0 // pred_fallthru
    _
  // Predicated region
  $region38: #{tpu_custom_call.1} parent=0 // pred_check
    _
  $region39: #{tpu_custom_call.1} parent=0 // pred_check_branch
    %241 = sbr.rel (0) target = $region41
  $region40: #{tpu_custom_call.1} parent=0 // pred_region
    _
  $region41: #{tpu_custom_call.1} parent=0 // pred_fallthru
    _

</llo_original>
